<compile_context>
chip_gen: v5e
topology: v5e:2x2
jax: 0.10.0
libtpu: 0.0.40
codegen_flags: <defaults>
</compile_context>

<pallas_src>
import functools

import jax
import jax.numpy as jnp
from jax import lax
from jax.experimental import pallas as pl
from jax.experimental.pallas import tpu as pltpu


def _round_up(a: int, b: int) -> int:
    return (a + b - 1) // b * b


def _rbf_logreg_kernel(xt_ref, basis_ref, bsq_ref, w_ref, b_ref, *out_refs,
                       rbf: str):
    xt = xt_ref[...]                         # (M, TK), caller's native dtype
    xt_f = xt.astype(jnp.float32)

    # Per-sample squared norm, produced directly in lane orientation (1, TK)
    # via a ones-row matmul (MXU; avoids a cross-sublane XLU reduction).
    ones_row = jnp.ones((1, xt_f.shape[0]), jnp.float32)
    x_sq = lax.dot_general(ones_row, xt_f * xt_f, (((1,), (0,)), ((), ())),
                           preferred_element_type=jnp.float32)       # (1, TK)

    # cross[j, i] = basis_j . x_i  -- MXU-native (N, M) x (M, TK) orientation,
    # operands kept in their native dtype (bf16 fast path), f32 accumulate.
    cross = lax.dot_general(basis_ref[...], xt, (((1,), (0,)), ((), ())),
                            preferred_element_type=jnp.float32)      # (N, TK)

    # ||x_i - basis_j||^2 in transposed layout; clamp rounding negatives.
    # bsq_ref is the hoisted, grid-invariant (N, 1) basis squared norm.
    phi_t = jnp.maximum(bsq_ref[...] + x_sq - 2.0 * cross, 0.0)      # (N, TK)

    w_row = w_ref[...]                                               # (1, N) f32

    if rbf == "gaussian":
        g = jnp.exp(-phi_t)                                          # EUP
        logits = jnp.dot(w_row, g, preferred_element_type=jnp.float32)
        out_refs[0][...] = jax.nn.sigmoid(logits + b_ref[0, 0])      # (1, TK)
    else:
        s = jnp.sqrt(phi_t) if rbf == "linear" else jnp.sqrt(1.0 + phi_t)
        # Raw (un-normalised) response; the global 1/max is folded into the
        # logits by the wrapper (cross-tile reduction).
        out_refs[0][...] = jnp.dot(w_row, s, preferred_element_type=jnp.float32)
        out_refs[1][...] = jnp.max(s, axis=0, keepdims=True)         # (1, TK)


def _choose_block_k(k: int, m: int, n: int, x_bytes: int) -> int:
    """Largest lane-aligned k-tile that fits a conservative VMEM budget, while
    keeping >= 2 tiles for large k so the 'parallel' axis can shard across the
    two TensorCores of a v7x chip."""
    if k <= 128:
        return _round_up(max(k, 8), 8)            # single small tile
    budget = 20 << 20                             # leaves headroom under v7x scoped VMEM
    # bytes per k-column: double-buffered streamed x + ~4x f32 (n,) intermediates
    per_col = 2 * m * x_bytes + 4 * n * 4
    cap = (budget // max(per_col, 1)) // 128 * 128
    cap = max(128, min(8192, cap))
    half = _round_up(pl.cdiv(k, 2), 128)          # >= 2 tiles when k is large
    return int(max(128, min(cap, half)))


def _vmem_footprint_bytes(m: int, n: int, block_k: int, x_bytes: int,
                          basis_bytes: int, n_outs: int) -> int:
    """Rough per-tile VMEM footprint used to set vmem_limit_bytes."""
    lane, sub, f32 = 128, 8, 4
    bk = _round_up(block_k, lane)
    xt_tile = 2 * _round_up(m, sub) * bk * x_bytes            # double-buffered stream
    basis_res = _round_up(n, sub) * _round_up(m, lane) * basis_bytes
    bsq_res = _round_up(n, sub) * lane * f32
    w_res = sub * _round_up(n, lane) * f32
    inter = 4 * _round_up(n, sub) * bk * f32                  # cross / phi_t / g / s slack
    outs = n_outs * 2 * sub * bk * f32
    return xt_tile + basis_res + bsq_res + w_res + inter + outs


def logistic_regression_rbf_forward(x, x_basis, w, b, rbf: str = "gaussian",
                                    block_k: int | None = None):
    """x: (k, m), x_basis: (n, m), w: (1, n), b: (1,)/(1,1) -> (k, 1) float32."""
    if rbf not in ("gaussian", "linear", "multiquadratic"):
        raise ValueError(f"unsupported rbf: {rbf}")
    k, m = x.shape
    n, m2 = x_basis.shape
    assert m == m2, "feature dims must match"
    assert w.shape == (1, n)
    b = jnp.asarray(b, jnp.float32).reshape(1, 1)

    # MXU operands share the caller's x dtype (bf16 fast path if provided).
    x_basis = x_basis.astype(x.dtype)
    x_bytes = jnp.dtype(x.dtype).itemsize

    if block_k is None:
        block_k = _choose_block_k(k, m, n, x_bytes)
    k_pad = _round_up(k, block_k)
    num_tiles = k_pad // block_k
    if num_tiles > 1 and block_k % 128 != 0:
        raise ValueError("block_k must be a multiple of 128 when tiling k")

    # Lane-dense streamed layout: x as (m, k_pad); tiles are (m, block_k).
    x_t = x.T
    if k_pad != k:
        x_t = jnp.pad(x_t, ((0, 0), (0, k_pad - k)))

    # Grid-invariant precomputation hoisted out of the kernel (done once).
    basis_f = x_basis.astype(jnp.float32)
    b_sq = jnp.sum(basis_f * basis_f, axis=1, keepdims=True)    # (n, 1) f32
    w_f = w.astype(jnp.float32)                                 # (1, n) f32

    kernel = functools.partial(_rbf_logreg_kernel, rbf=rbf)

    in_specs = [
        pl.BlockSpec((m, block_k), lambda i: (0, i)),           # x tile (streams)
        pl.BlockSpec((n, m), lambda i: (0, 0)),                 # basis (resident)
        pl.BlockSpec((n, 1), lambda i: (0, 0)),                 # ||basis||^2 (resident)
        pl.BlockSpec((1, n), lambda i: (0, 0)),                 # W (resident)
        pl.BlockSpec(memory_space=pltpu.MemorySpace.SMEM),      # bias scalar
    ]
    lane_out = jax.ShapeDtypeStruct((1, k_pad), jnp.float32)
    out_spec = pl.BlockSpec((1, block_k), lambda i: (0, i))

    if rbf == "gaussian":
        out_shape, out_specs, n_outs = lane_out, out_spec, 1
    else:
        out_shape, out_specs, n_outs = (lane_out, lane_out), (out_spec, out_spec), 2

    footprint = _vmem_footprint_bytes(m, n, block_k, x_bytes, x_bytes, n_outs)
    vmem_limit = int(min(56 << 20, max(2 * footprint, 32 << 20)))

    result = pl.pallas_call(
        kernel,
        grid=(num_tiles,),
        in_specs=in_specs,
        out_specs=out_specs,
        out_shape=out_shape,
        compiler_params=pltpu.CompilerParams(
            dimension_semantics=("parallel",),
            vmem_limit_bytes=vmem_limit),
    )(x_t, x_basis, b_sq, w_f, b)

    if rbf == "gaussian":
        return result[:, :k].reshape(k, 1)

    raw, col_max = result
    raw = raw[:, :k]
    # Global max over the valid (k, n) phi (padded columns are sliced away).
    # eps guard avoids 0/0 when every x equals a basis point (the torch
    # reference returns NaN there; we intentionally return finite values).
    g_max = jnp.maximum(jnp.max(col_max[:, :k]), jnp.float32(1e-30))
    # logits = (sqrt_phi @ W.T) / max + b  ==  (sqrt_phi / max) @ W.T + b.
    return jax.nn.sigmoid(raw / g_max + b[0, 0]).reshape(k, 1)


def _reference_forward(x, x_basis, w, b, rbf: str = "gaussian"):
    """Pure-JAX reference mirroring the torch tile-based phi construction."""
    diff = x[:, None, :] - x_basis[None, :, :]          # (k, n, m)
    phi = jnp.sum(diff * diff, axis=-1)                 # (k, n)
    if rbf == "linear":
        phi = jnp.sqrt(phi)
        phi = phi / jnp.max(phi)
    elif rbf == "gaussian":
        phi = jnp.exp(-phi)
    elif rbf == "multiquadratic":
        phi = jnp.sqrt(1.0 + phi)
        phi = phi / jnp.max(phi)
    return jax.nn.sigmoid(phi @ w.T + b.reshape(1, 1))  # (k, 1)


if __name__ == "__main__":
    key = jax.random.PRNGKey(0)
    k_xa, k_xb, k_xc, k_basis, k_w, k_b = jax.random.split(key, 6)

    m, n = 32, 16
    scale = 0.2  # keep pairwise distances O(1) so gaussian is non-degenerate
    x_basis = scale * jax.random.normal(k_basis, (n, m), dtype=jnp.float32)
    bound = 1.0 / (n ** 0.5)  # torch.nn.Linear(n, 1) init range
    w = jax.random.uniform(k_w, (1, n), jnp.float32, -bound, bound)
    b = jax.random.uniform(k_b, (1, 1), jnp.float32, -bound, bound)

    # A: small, unaligned k -> single-tile path (k padded 12 -> 16).
    x_a = scale * jax.random.normal(k_xa, (12, m), dtype=jnp.float32)
    # B: k=200, auto tile selection -> 128-wide tiles, 2-tile "parallel" grid.
    x_b = scale * jax.random.normal(k_xb, (200, m), dtype=jnp.float32)
    # C: k=300 with explicit 128-wide tiles -> 3-tile grid path.
    x_c = scale * jax.random.normal(k_xc, (300, m), dtype=jnp.float32)

    for name, xs, blk in (("A", x_a, None), ("B", x_b, None), ("C", x_c, 128)):
        for rbf in ("gaussian", "linear", "multiquadratic"):
            out = logistic_regression_rbf_forward(xs, x_basis, w, b,
                                                  rbf=rbf, block_k=blk)
            out = jax.block_until_ready(out)
            ref = _reference_forward(xs, x_basis, w, b, rbf=rbf)
            assert out.shape == (xs.shape[0], 1)
            assert jnp.allclose(out, ref, atol=3e-5, rtol=1e-4), (
                name, rbf, float(jnp.max(jnp.abs(out - ref))))

    print("KERNEL_OK")
</pallas_src>

<mosaic_0001>
module attributes {stable_mosaic.version = 11 : i64} {
  func.func @_rbf_logreg_kernel(%arg0: i32, %arg1: memref<32x16xf32, #tpu.memory_space<vmem>>, %arg2: memref<16x32xf32, #tpu.memory_space<vmem>>, %arg3: memref<16x1xf32, #tpu.memory_space<vmem>>, %arg4: memref<1x16xf32, #tpu.memory_space<vmem>>, %arg5: memref<1x1xf32, #tpu.memory_space<smem>>, %arg6: memref<1x16xf32, #tpu.memory_space<vmem>>) attributes {dimension_semantics = [#tpu.dimension_semantics<parallel>], iteration_bounds = array<i64: 1>, scalar_prefetch = 0 : i64, scratch_operands = 0 : i64, tpu.core_type = #tpu.core_type<tc>, window_params = [{transform_indices = @transform_0, window_bounds = array<i64: 32, 16>}, {pipeline_mode = #tpu.pipeline_mode<synchronous>, transform_indices = @transform_1, window_bounds = array<i64: 16, 32>}, {pipeline_mode = #tpu.pipeline_mode<synchronous>, transform_indices = @transform_2, window_bounds = array<i64: 16, 1>}, {pipeline_mode = #tpu.pipeline_mode<synchronous>, transform_indices = @transform_3, window_bounds = array<i64: 1, 16>}, {transform_indices = @transform_4, window_bounds = array<i64: 1, 1>}, {transform_indices = @transform_5, window_bounds = array<i64: 1, 16>}]} {
    %c0 = arith.constant 0 : index
    %c0_0 = arith.constant 0 : index
    %0 = vector.load %arg1[%c0, %c0_0] : memref<32x16xf32, #tpu.memory_space<vmem>>, vector<32x16xf32>
    %cst = arith.constant 1.000000e+00 : f32
    %1 = vector.broadcast %cst : f32 to vector<1x32xf32>
    %2 = arith.mulf %0, %0 : vector<32x16xf32>
    %cst_1 = arith.constant dense<0.000000e+00> : vector<1x16xf32>
    %3 = tpu.matmul %1, %2, %cst_1 {dimension_numbers = #tpu.dot_dimension_numbers<[1], [0], [0], [1], [0, 0, 1, 1], [], []>} : vector<1x32xf32>, vector<32x16xf32>, vector<1x16xf32> -> vector<1x16xf32>
    %c0_2 = arith.constant 0 : index
    %c0_3 = arith.constant 0 : index
    %4 = vector.load %arg2[%c0_2, %c0_3] : memref<16x32xf32, #tpu.memory_space<vmem>>, vector<16x32xf32>
    %cst_4 = arith.constant dense<0.000000e+00> : vector<16x16xf32>
    %5 = tpu.matmul %4, %0, %cst_4 {dimension_numbers = #tpu.dot_dimension_numbers<[1], [0], [0], [1], [0, 0, 1, 1], [], []>} : vector<16x32xf32>, vector<32x16xf32>, vector<16x16xf32> -> vector<16x16xf32>
    %c0_5 = arith.constant 0 : index
    %c0_6 = arith.constant 0 : index
    %6 = vector.load %arg3[%c0_5, %c0_6] : memref<16x1xf32, #tpu.memory_space<vmem>>, vector<16x1xf32>
    %7 = vector.broadcast %6 : vector<16x1xf32> to vector<16x16xf32>
    %8 = vector.broadcast %3 : vector<1x16xf32> to vector<16x16xf32>
    %9 = arith.addf %7, %8 : vector<16x16xf32>
    %cst_7 = arith.constant 2.000000e+00 : f32
    %10 = vector.broadcast %cst_7 : f32 to vector<16x16xf32>
    %11 = arith.mulf %10, %5 : vector<16x16xf32>
    %12 = arith.subf %9, %11 : vector<16x16xf32>
    %cst_8 = arith.constant 0.000000e+00 : f32
    %13 = vector.broadcast %cst_8 : f32 to vector<16x16xf32>
    %14 = arith.maximumf %12, %13 : vector<16x16xf32>
    %c0_9 = arith.constant 0 : index
    %c0_10 = arith.constant 0 : index
    %15 = vector.load %arg4[%c0_9, %c0_10] : memref<1x16xf32, #tpu.memory_space<vmem>>, vector<1x16xf32>
    %cst_11 = arith.constant 0.000000e+00 : f32
    %16 = vector.broadcast %cst_11 : f32 to vector<16x16xf32>
    %17 = arith.subf %16, %14 : vector<16x16xf32>
    %18 = math.exp %17 : vector<16x16xf32>
    %cst_12 = arith.constant dense<0.000000e+00> : vector<1x16xf32>
    %19 = tpu.matmul %15, %18, %cst_12 {dimension_numbers = #tpu.dot_dimension_numbers<[1], [0], [0], [1], [0, 0, 1, 1], [], []>} : vector<1x16xf32>, vector<16x16xf32>, vector<1x16xf32> -> vector<1x16xf32>
    %c0_13 = arith.constant 0 : index
    %c0_14 = arith.constant 0 : index
    %20 = memref.load %arg5[%c0_13, %c0_14] : memref<1x1xf32, #tpu.memory_space<smem>>
    %21 = vector.broadcast %20 : f32 to vector<1x16xf32>
    %22 = arith.addf %19, %21 : vector<1x16xf32>
    %23 = arith.negf %22 : vector<1x16xf32>
    %24 = math.exp %23 : vector<1x16xf32>
    %cst_15 = arith.constant 1.000000e+00 : f32
    %25 = vector.broadcast %cst_15 : f32 to vector<1x16xf32>
    %26 = arith.addf %25, %24 : vector<1x16xf32>
    %27 = arith.divf %25, %26 : vector<1x16xf32>
    %c0_16 = arith.constant 0 : index
    %c0_17 = arith.constant 0 : index
    %28 = vector.load %arg6[%c0_16, %c0_17] : memref<1x16xf32, #tpu.memory_space<vmem>>, vector<1x16xf32>
    tpu.vector_store %arg6[%c0_16, %c0_17], %27 {strides = array<i32>} : memref<1x16xf32, #tpu.memory_space<vmem>>, vector<1x16xf32>,
    return
  }
  func.func @transform_0(%arg0: i32) -> (i32, i32) {
    %c0_i32 = arith.constant 0 : i32
    %c0_i32_0 = arith.constant 0 : i32
    return %c0_i32, %arg0 : i32, i32
  }
  func.func @transform_1(%arg0: i32) -> (i32, i32) {
    %c0_i32 = arith.constant 0 : i32
    %c0_i32_0 = arith.constant 0 : i32
    %c0_i32_1 = arith.constant 0 : i32
    return %c0_i32, %c0_i32_0 : i32, i32
  }
  func.func @transform_2(%arg0: i32) -> (i32, i32) {
    %c0_i32 = arith.constant 0 : i32
    %c0_i32_0 = arith.constant 0 : i32
    %c0_i32_1 = arith.constant 0 : i32
    return %c0_i32, %c0_i32_0 : i32, i32
  }
  func.func @transform_3(%arg0: i32) -> (i32, i32) {
    %c0_i32 = arith.constant 0 : i32
    %c0_i32_0 = arith.constant 0 : i32
    %c0_i32_1 = arith.constant 0 : i32
    return %c0_i32, %c0_i32_0 : i32, i32
  }
  func.func @transform_4(%arg0: i32) -> (i32, i32) {
    %c0_i32 = arith.constant 0 : i32
    %c0_i32_0 = arith.constant 0 : i32
    %c0_i32_1 = arith.constant 0 : i32
    return %c0_i32, %c0_i32_0 : i32, i32
  }
  func.func @transform_5(%arg0: i32) -> (i32, i32) {
    %c0_i32 = arith.constant 0 : i32
    %c0_i32_0 = arith.constant 0 : i32
    return %c0_i32, %arg0 : i32, i32
  }
}

</mosaic_0001>

<llo_original>
// kernel: tpu_custom_call.1
$region0: #{tpu_custom_call.1}
  #allocation0 [shape = 'u32[]', space=smem, size = 0x4, offset = 0x4, fixed_abs, tag = 'smem constant byte address 0x4 - core index']
  #allocation1 [shape = 'u32[72,128]{1,0:T(1,128)}', space=vmem, size = 0x9000, scoped, tag = 'internal scratch']
  #allocation2 [shape = 'f32[1,1]{1,0:T(1,128)S(6)}', space=smem, size = 0x200, scoped, tag = 'scoped memory for tpu_custom_call.1']
  %s0 = inlined_call_operand.vmem [shape: f32[32,16], index: 0, kind: input, shape index: {}]
  %s1 = inlined_call_operand.vmem [shape: f32[16,32], index: 1, kind: input, shape index: {}]
  %s2 = inlined_call_operand.vmem [shape: f32[16,1], index: 2, kind: input, shape index: {}]
  %s3 = inlined_call_operand.vmem [shape: f32[1,16], index: 3, kind: input, shape index: {}]
  %s4 = inlined_call_operand.<no memory space> [shape: f32[1,1], index: 4, kind: input, shape index: {}]
  %s5 = inlined_call_operand.hbm [shape: f32[1,16], index: 5, kind: output, shape index: {}]
  %s6 = sld [smem:[#allocation0]]
  $region30: #{tpu_custom_call.1} parent=0
    _
  %s8 = ssub.s32 1, %s6
  %s9 = scalar_select 0, %s8, %s6
  %10 = sst [smem:[#allocation2]] %s4
  $region1: #{tpu_custom_call.1} parent=0
    #allocation3 [shape = 'u8[512]{0}', space=vmem, size = 0x400, scoped, tag = 'output window, operand 0, single buffered']
    #allocation4 [shape = 's32[1]{0}', space=sflag, size = 0x4, scoped, tag = 'scoped memory for tpu_custom_call.1']
    %11 = vsyncpa [#allocation4], 0
    // Predicated region
    $region2: #{tpu_custom_call.1} parent=1 // pred_check
      _
    $region3: #{tpu_custom_call.1} parent=1 // pred_check_branch
      %13 = sbr.rel (0) target = $region5
    $region4: #{tpu_custom_call.1} parent=1 // pred_region
      _
    $region5: #{tpu_custom_call.1} parent=1 // pred_fallthru
      _
    // Predicated region
    $region6: #{tpu_custom_call.1} parent=1 // pred_check
      _
    $region7: #{tpu_custom_call.1} parent=1 // pred_check_branch
      %15 = sbr.rel (0) target = $region9
    $region8: #{tpu_custom_call.1} parent=1 // pred_region
      _
    $region9: #{tpu_custom_call.1} parent=1 // pred_fallthru
      _
    // Predicated region
    $region10: #{tpu_custom_call.1} parent=1 // pred_check
      _
    $region11: #{tpu_custom_call.1} parent=1 // pred_check_branch
      %17 = sbr.rel (0) target = $region13
    $region12: #{tpu_custom_call.1} parent=1 // pred_region
      _
    $region13: #{tpu_custom_call.1} parent=1 // pred_fallthru
      _
    // Predicated region
    $region14: #{tpu_custom_call.1} parent=1 // pred_check
      _
    $region15: #{tpu_custom_call.1} parent=1 // pred_check_branch
      %19 = sbr.rel (0) target = $region17
    $region16: #{tpu_custom_call.1} parent=1 // pred_region
      _
    $region17: #{tpu_custom_call.1} parent=1 // pred_fallthru
      _
    // Predicated region
    $region18: #{tpu_custom_call.1} parent=1 // pred_check
      _
    $region19: #{tpu_custom_call.1} parent=1 // pred_check_branch
      %21 = sbr.rel (0) target = $region21
    $region20: #{tpu_custom_call.1} parent=1 // pred_region
      _
    $region21: #{tpu_custom_call.1} parent=1 // pred_fallthru
      _
    %v22 = vld [vmem:[%s0] sm:$0xff]
    %v23 = vld [vmem:[%s0 + $0x8] sm:$0xff]
    %v24 = vld [vmem:[%s0 + $0x10] sm:$0xff]
    %v25 = vld [vmem:[%s0 + $0x18] sm:$0xff]
    %v26 = vmul.f32 %v22, %v22
    %v27 = vmul.f32 %v23, %v23
    %v28 = vmul.f32 %v24, %v24
    %v29 = vmul.f32 %v25, %v25
    %vm30 = vcmask 261120
    %v32 = vsel %vm30, 1.0, 0
    %34 = vmatpush.msra.mxu0 0.0
    %35 = vmatpush.msra.mxu0 0.0
    %36 = vmatpush.msra.mxu0 0.0
    %37 = vmatpush.msra.mxu0 0.0
    %38 = vmatpush.msra.mxu0 0.0
    %39 = vmatpush.msra.mxu0 0.0
    %40 = vmatpush.msra.mxu0 0.0
    %41 = vmatpush.msra.mxu0 0.0
    %42 = vmatpush.msra.mxu0 0.0
    %43 = vmatpush.msra.mxu0 0.0
    %44 = vmatpush.msra.mxu0 0.0
    %45 = vmatpush.msra.mxu0 0.0
    %46 = vmatpush.msra.mxu0 %v29
    %47 = vmatpush.msra.mxu0 %v28
    %48 = vmatpush.msra.mxu0 %v27
    %49 = vmatpush.msra.mxu0 %v26
    %50 = vmatmul.f32.gmra.mxu0 %v32
    %v51 = vpop.f32.mrf.mxu0
    %v52 = vadd.f32 0.0, %v51
    %53 = vdwg.mxu0
    %v54 = vld [vmem:[%s1] sm:$0xff]
    %v55 = vld [vmem:[%s1 + $0x8] sm:$0xff]
    %v57 = vsel %vm30, %v54, 0
    %v60 = vsel %vm30, %v55, 0
    %62 = vmatpush.msra.mxu0 0.0
    %63 = vmatpush.msra.mxu0 0.0
    %64 = vmatpush.msra.mxu0 0.0
    %65 = vmatpush.msra.mxu0 0.0
    %66 = vmatpush.msra.mxu0 0.0
    %67 = vmatpush.msra.mxu0 0.0
    %68 = vmatpush.msra.mxu0 0.0
    %69 = vmatpush.msra.mxu0 0.0
    %70 = vmatpush.msra.mxu0 0.0
    %71 = vmatpush.msra.mxu0 0.0
    %72 = vmatpush.msra.mxu0 0.0
    %73 = vmatpush.msra.mxu0 0.0
    %74 = vmatpush.msra.mxu0 %v25
    %75 = vmatpush.msra.mxu0 %v24
    %76 = vmatpush.msra.mxu0 %v23
    %77 = vmatpush.msra.mxu0 %v22
    %78 = vmatmul.f32.gmra.mxu0 %v57
    %v79 = vpop.f32.mrf.mxu0
    %v80 = vadd.f32 0.0, %v79
    %81 = vmatmul.f32.gmra.mxu0 %v60
    %v82 = vpop.f32.mrf.mxu0
    %v83 = vadd.f32 0.0, %v82
    %84 = vdwg.mxu0
    %v85 = vld [vmem:[%s2] sm:$0xff]
    %v86 = vld [vmem:[%s2 + $0x8] sm:$0xff]
    %88 = vset.pattern.permute.xlu0 0
    %89 = vperm.xlu0 %88, %v85
    %v90 = vpop.permute.xlu0 %89
    %93 = vset.pattern.permute.xlu0 0
    %94 = vperm.xlu0 %93, %v86
    %v95 = vpop.permute.xlu0 %94
    %v97 = vperm.slane %v52, 0
    %v98 = vadd.f32 %v90, %v97
    %v99 = vadd.f32 %v95, %v97
    %v100 = vmul.f32 %v80, 2.0
    %v101 = vmul.f32 %v83, 2.0
    %v102 = vsub.f32 %v98, %v100
    %v103 = vsub.f32 %v99, %v101
    %v104 = vmax.f32 %v102, 0.0
    %v105 = vmax.f32 %v103, 0.0
    %v106 = vld [vmem:[%s3] sm:$0x1]
    %v107 = vsub.f32 0.0, %v104
    %v108 = vsub.f32 0.0, %v105
    %v109 = vmul.f32 %v107, 1.442695
    %v110 = vpow.pop %v109
    %v111 = vmul.f32 %v108, 1.442695
    %v112 = vpow.pop %v111
    %s113 = sld [smem:[#allocation2]]
    %v114 = vstv %s113
    %vm115 = vcmask 130048
    %v117 = vsel %vm115, %v106, 0
    %119 = vmatpush.msra.mxu0 0.0
    %120 = vmatpush.msra.mxu0 0.0
    %121 = vmatpush.msra.mxu0 0.0
    %122 = vmatpush.msra.mxu0 0.0
    %123 = vmatpush.msra.mxu0 0.0
    %124 = vmatpush.msra.mxu0 0.0
    %125 = vmatpush.msra.mxu0 0.0
    %126 = vmatpush.msra.mxu0 0.0
    %127 = vmatpush.msra.mxu0 0.0
    %128 = vmatpush.msra.mxu0 0.0
    %129 = vmatpush.msra.mxu0 0.0
    %130 = vmatpush.msra.mxu0 0.0
    %131 = vmatpush.msra.mxu0 0.0
    %132 = vmatpush.msra.mxu0 0.0
    %133 = vmatpush.msra.mxu0 %v112
    %134 = vmatpush.msra.mxu0 %v110
    %135 = vmatmul.f32.gmra.mxu0 %v117
    %v136 = vpop.f32.mrf.mxu0
    %v137 = vadd.f32 %v114, %v136
    %138 = vdwg.mxu0
    %v139 = vxor.u32 %v137, 2147483648
    %v140 = vmul.f32 %v139, 1.442695
    %v141 = vpow.pop %v140
    %v142 = vadd.f32 %v141, 1.0
    %v143 = vrcp.pop %v142
    %v144 = vmul.f32 %v142, %v143
    %v145 = vsub.f32 1.0, %v144
    %v146 = vmul.f32 %v143, %v145
    %v147 = vadd.f32 %v143, %v146
    %vm148 = vweird.f32 %v142
    %vm149 = vweird.f32 %v143
    %vm150 = vmor %vm148, %vm149
    %v151 = vsel %vm150, %v143, %v147
    %v152 = vand.u32 2147483647, %v142
    %vm153 = vcmp.eq.f32.partialorder %v152, 8.507059e+37
    %v154 = vand.u32 %v142, 2147483648
    %v155 = vor.u32 1.1754944e-38, %v154
    %v156 = vsel %vm153, %v155, %v151
    %v157 = vmul.f32 1.0, %v156
    %vm158 = vcmask 122880
    %159 = vst.msk [vmem:[#allocation3] sm:$0x1] %vm158, %v157
    // Predicated region
    $region22: #{tpu_custom_call.1} parent=1 // pred_check
      _
    $region23: #{tpu_custom_call.1} parent=1 // pred_check_branch
      %161 = sbr.rel (0) target = $region25
    $region24: #{tpu_custom_call.1} parent=1 // pred_region
      %163 = vsyncadd [#allocation4], 0
      %s165 = sshll.u32 [#allocation3], 4
      %s166 = int_to_ptr.vmem [resolvable:$true] %s165
      %s167 = sshll.u32 %s5, 4
      %s168 = int_to_ptr.hbm [resolvable:$true] %s167
      %170 = dma.vmem_to_hbm [thread:$0]  %s166, 16, %s168, [#allocation4]
    $region25: #{tpu_custom_call.1} parent=1 // pred_fallthru
      _
    // Predicated region
    $region26: #{tpu_custom_call.1} parent=1 // pred_check
      _
    $region27: #{tpu_custom_call.1} parent=1 // pred_check_branch
      %172 = sbr.rel (0) target = $region29
    $region28: #{tpu_custom_call.1} parent=1 // pred_region
      %174 = dma.done [#allocation4], 16
    $region29: #{tpu_custom_call.1} parent=1 // pred_fallthru
      _
    %175 = vsyncpa [#allocation4], 1

</llo_original>
